<compile_context>
chip_gen: v7x
topology: tpu7x:2x2x1
jax: 0.10.0
libtpu: 0.0.40
codegen_flags: <defaults>
</compile_context>

<pallas_src>
import functools

import jax
import jax.numpy as jnp
from jax.experimental import pallas as pl
from jax.experimental.pallas import tpu as pltpu


def _round_up(x, m):
    return ((x + m - 1) // m) * m


# ---------------------------------------------------------------------------
# Shared tiled matmul-plus-bias kernel (used for both projections).
# ---------------------------------------------------------------------------
def _matmul_bias_kernel(x_ref, w_ref, b_ref, out_ref):
    out_ref[...] = (jnp.dot(x_ref[...], w_ref[...],
                            preferred_element_type=jnp.float32)
                    + b_ref[...]).astype(out_ref.dtype)


def _tiled_matmul_bias(x, w, b, out_dtype, *, tile_m=256, tile_n=256):
    """out = x @ w + b with fixed tiles and explicit padding.

    x: (M, K)   (K already lane-aligned; contraction kept un-tiled)
    w: (K, N)
    b: (1, N)
    Grid is (n_tiles, m_tiles) with rows innermost, so the (K, tile_n) weight
    block has a constant block index across the inner axis (no re-streaming of
    the large weight per row tile).  Both axes are "parallel" (v7x megacore).
    """
    M, K = x.shape
    N = w.shape[1]

    tm = min(tile_m, _round_up(M, 8))
    tn = min(tile_n, _round_up(N, 128))
    Mp = _round_up(M, tm)
    Np = _round_up(N, tn)

    xp = jnp.pad(x, ((0, Mp - M), (0, 0)))
    wp = jnp.pad(w, ((0, 0), (0, Np - N)))
    bp = jnp.pad(b, ((0, 0), (0, Np - N)))

    out = pl.pallas_call(
        _matmul_bias_kernel,
        out_shape=jax.ShapeDtypeStruct((Mp, Np), out_dtype),
        grid_spec=pltpu.PrefetchScalarGridSpec(
            num_scalar_prefetch=0,
            grid=(Np // tn, Mp // tm),                       # rows innermost
            in_specs=[
                pl.BlockSpec((tm, K), lambda n, m: (m, 0)),
                pl.BlockSpec((K, tn), lambda n, m: (0, n)),  # const over inner m
                pl.BlockSpec((1, tn), lambda n, m: (0, n)),
            ],
            out_specs=pl.BlockSpec((tm, tn), lambda n, m: (m, n)),
        ),
        compiler_params=pltpu.CompilerParams(
            dimension_semantics=("parallel", "parallel")),
    )(xp, wp, bp)
    return out[:M, :N]


# ---------------------------------------------------------------------------
# Serial LSTM recurrence: grid = (batch_chunks, T); h/c live in VMEM scratch.
# ---------------------------------------------------------------------------
def _lstm_recurrence_kernel(xw_ref, whh_ref, hs_ref, h_scr, c_scr, *, hidden_pad):
    """xw_ref : (1, bb, 4*Hp) f32  precomputed x@W_ih^T + (b_ih+b_hh), step t
       whh_ref: (Hp, 4*Hp)   bf16  W_hh^T (constant block index -> resident)
       hs_ref : (1, bb, Hp)  bf16  hidden state for step t (streamed out)
       h_scr/c_scr: (bb, Hp) f32   recurrent state, persists across grid steps
    """
    Hp = hidden_pad

    @pl.when(pl.program_id(1) == 0)
    def _():
        h_scr[...] = jnp.zeros_like(h_scr)
        c_scr[...] = jnp.zeros_like(c_scr)

    gates = (jnp.dot(h_scr[...].astype(jnp.bfloat16), whh_ref[...],
                     preferred_element_type=jnp.float32)
             + xw_ref[0])                                   # f32 (bb, 4*Hp)

    def sig(z):  # sigmoid(z) = 0.5*(tanh(z/2)+1): single EUP push per gate
        return 0.5 * (jnp.tanh(0.5 * z) + 1.0)

    # Lane-aligned gate slices (Hp multiple of 128): no XLU shuffles.
    i = sig(gates[:, 0 * Hp:1 * Hp])
    f = sig(gates[:, 1 * Hp:2 * Hp])
    g = jnp.tanh(gates[:, 2 * Hp:3 * Hp])
    o = sig(gates[:, 3 * Hp:4 * Hp])

    c_new = f * c_scr[...] + i * g                          # state math stays f32
    h_new = o * jnp.tanh(c_new)
    c_scr[...] = c_new
    h_scr[...] = h_new
    hs_ref[0] = h_new.astype(hs_ref.dtype)


# ---------------------------------------------------------------------------
# Forward pass
# ---------------------------------------------------------------------------
def decoder_rnn_forward(features, captions, params):
    """Pallas implementation of DecoderRNN.forward.

    features: (B, E) float32, captions: (B, L) int32
    returns : (B, L, V) float32 logits, batch_first (T = L)
    """
    E = params["embedding"].shape[1]
    H = params["w_hh"].shape[1]
    V = params["w_out"].shape[0]
    B = features.shape[0]

    # --- glue (plain JAX): embedding gather + concat with image feature ------
    cap = captions[:, :-1]                                          # (B, L-1)
    emb = jnp.take(params["embedding"], cap, axis=0)                # (B, L-1, E)
    inputs = jnp.concatenate([features[:, None, :], emb], axis=1)   # (B, T, E)
    T = inputs.shape[1]

    # --- TPU-aligned padded sizes --------------------------------------------
    Ep = _round_up(E, 128)
    Hp = _round_up(H, 128)
    if B > 8:
        Bp = _round_up(B, 16)
        block_b = Bp // 2        # v7x: two TensorCores each run one batch chunk
    else:
        Bp = 8
        block_b = Bp
    n_bchunks = Bp // block_b

    # time-major, padded, bf16 matmul operand
    x = jnp.transpose(inputs, (1, 0, 2))                            # (T, B, E)
    x = jnp.pad(x, ((0, 0), (0, Bp - B), (0, Ep - E))).astype(jnp.bfloat16)

    # LSTM weights: pad each of the 4 gate blocks to Hp so gate slices are
    # lane-aligned; zero padding keeps padded hidden lanes exactly 0 (inert).
    w_ih = jnp.pad(params["w_ih"].reshape(4, H, E),
                   ((0, 0), (0, Hp - H), (0, Ep - E))).reshape(4 * Hp, Ep)
    w_hh = jnp.pad(params["w_hh"].reshape(4, H, H),
                   ((0, 0), (0, Hp - H), (0, Hp - H))).reshape(4 * Hp, Hp)
    b_lstm = jnp.pad((params["b_ih"] + params["b_hh"]).reshape(4, H),
                     ((0, 0), (0, Hp - H))).reshape(1, 4 * Hp).astype(jnp.float32)
    w_ih_t = w_ih.T.astype(jnp.bfloat16)                            # (Ep, 4Hp)
    w_hh_t = w_hh.T.astype(jnp.bfloat16)                            # (Hp, 4Hp)

    # --- kernel 1: input projection hoisted out of the recurrence ------------
    # One big (T*Bp, Ep) @ (Ep, 4Hp) matmul; bias folded in here so nothing is
    # re-broadcast inside the serial loop.
    xw_flat = _tiled_matmul_bias(x.reshape(T * Bp, Ep), w_ih_t, b_lstm,
                                 jnp.float32)                       # (T*Bp, 4Hp)
    xw = xw_flat.reshape(T, Bp, 4 * Hp)

    # --- kernel 2: serial LSTM recurrence, Xw/hseq streamed over T -----------
    est = (2 * (block_b * 4 * Hp * 4 + Hp * 4 * Hp * 2 + block_b * Hp * 2)
           + 2 * block_b * Hp * 4 + (4 << 20))
    vmem_limit = int(min(max(est, 32 << 20), 100 << 20))

    hs = pl.pallas_call(
        functools.partial(_lstm_recurrence_kernel, hidden_pad=Hp),
        out_shape=jax.ShapeDtypeStruct((T, Bp, Hp), jnp.bfloat16),
        grid_spec=pltpu.PrefetchScalarGridSpec(
            num_scalar_prefetch=0,
            grid=(n_bchunks, T),
            in_specs=[
                pl.BlockSpec((1, block_b, 4 * Hp), lambda b, t: (t, b, 0)),
                pl.BlockSpec((Hp, 4 * Hp), lambda b, t: (0, 0)),    # resident
            ],
            out_specs=pl.BlockSpec((1, block_b, Hp), lambda b, t: (t, b, 0)),
            scratch_shapes=[pltpu.VMEM((block_b, Hp), jnp.float32),
                            pltpu.VMEM((block_b, Hp), jnp.float32)],
        ),
        compiler_params=pltpu.CompilerParams(
            dimension_semantics=("parallel", "arbitrary"),
            vmem_limit_bytes=vmem_limit),
    )(xw, w_hh_t)                                                   # (T, Bp, Hp)

    # Batch-major rows so the big logits come out batch_first directly; this
    # transpose only touches the small H-sized hidden tensor, never V.
    hs_bm = jnp.transpose(hs, (1, 0, 2)).reshape(Bp * T, Hp)        # (Bp*T, Hp)

    # --- kernel 3: hidden -> vocab projection ---------------------------------
    w_out_t = jnp.pad(params["w_out"].T, ((0, Hp - H), (0, 0))).astype(jnp.bfloat16)
    b_out = params["b_out"].reshape(1, V).astype(jnp.float32)
    # TODO(synk): emit bf16 logits here if downstream tolerates it (projection
    # is HBM-write-bound on v6e/v7x); kept f32 to match the torch module.
    logits_flat = _tiled_matmul_bias(hs_bm, w_out_t, b_out, jnp.float32)  # (Bp*T, V)

    return logits_flat.reshape(Bp, T, V)[:B]                        # (B, T, V)


# ---------------------------------------------------------------------------
# Pure-JAX f32 reference (mirrors torch semantics) for correctness check.
# ---------------------------------------------------------------------------
def _reference_forward(features, captions, params):
    cap = captions[:, :-1]
    emb = jnp.take(params["embedding"], cap, axis=0)
    inputs = jnp.concatenate([features[:, None, :], emb], axis=1)   # (B, T, E)
    H = params["w_hh"].shape[1]
    B = features.shape[0]

    def step(carry, x_t):
        h, c = carry
        gates = (x_t @ params["w_ih"].T + h @ params["w_hh"].T
                 + params["b_ih"] + params["b_hh"])
        i = jax.nn.sigmoid(gates[:, 0 * H:1 * H])
        f = jax.nn.sigmoid(gates[:, 1 * H:2 * H])
        g = jnp.tanh(gates[:, 2 * H:3 * H])
        o = jax.nn.sigmoid(gates[:, 3 * H:4 * H])
        c = f * c + i * g
        h = o * jnp.tanh(c)
        return (h, c), h

    h0 = jnp.zeros((B, H), jnp.float32)
    c0 = jnp.zeros((B, H), jnp.float32)
    _, hs = jax.lax.scan(step, (h0, c0), jnp.transpose(inputs, (1, 0, 2)))
    hs = jnp.transpose(hs, (1, 0, 2))                               # (B, T, H)
    return hs @ params["w_out"].T + params["b_out"]


def make_params(key, embed_size, hidden_size, vocab_size):
    ks = jax.random.split(key, 7)
    s = 0.1
    return {
        "embedding": s * jax.random.normal(ks[0], (vocab_size, embed_size), jnp.float32),
        "w_ih": s * jax.random.normal(ks[1], (4 * hidden_size, embed_size), jnp.float32),
        "w_hh": s * jax.random.normal(ks[2], (4 * hidden_size, hidden_size), jnp.float32),
        "b_ih": s * jax.random.normal(ks[3], (4 * hidden_size,), jnp.float32),
        "b_hh": s * jax.random.normal(ks[4], (4 * hidden_size,), jnp.float32),
        "w_out": s * jax.random.normal(ks[5], (vocab_size, hidden_size), jnp.float32),
        "b_out": s * jax.random.normal(ks[6], (vocab_size,), jnp.float32),
    }


def _run_case(key, embed_size, hidden_size, vocab_size, batch, caption_len):
    k_feat, k_cap, k_par = jax.random.split(key, 3)
    features = jax.random.normal(k_feat, (batch, embed_size), jnp.float32)
    captions = jax.random.randint(k_cap, (batch, caption_len), 0, vocab_size,
                                  dtype=jnp.int32)
    params = make_params(k_par, embed_size, hidden_size, vocab_size)

    out = decoder_rnn_forward(features, captions, params)
    out = jax.block_until_ready(out)

    ref = _reference_forward(features, captions, params)
    assert out.shape == (batch, caption_len, vocab_size), out.shape
    err = float(jnp.max(jnp.abs(out - ref)))
    # bf16 matmul operands (f32 accumulation) vs f32 reference -> loosened tol.
    assert jnp.allclose(out, ref, rtol=3e-2, atol=3e-2), f"max abs err {err}"


if __name__ == "__main__":
    key = jax.random.PRNGKey(0)
    k1, k2 = jax.random.split(key)

    # Small baseline case (single tile everywhere).
    _run_case(k1, embed_size=32, hidden_size=32, vocab_size=40,
              batch=2, caption_len=8)

    # Multi-tile case: padded gate lanes (H=160 -> Hp=256), several 128-wide
    # vocab/gate tiles, row count not a multiple of the 256 row tile.
    _run_case(k2, embed_size=64, hidden_size=160, vocab_size=300,
              batch=4, caption_len=7)

    print("KERNEL_OK")
</pallas_src>

<mosaic_0001>
module attributes {stable_mosaic.version = 11 : i64} {
  func.func @_matmul_bias_kernel(%arg0: i32, %arg1: i32, %arg2: memref<64x128xbf16, #tpu.memory_space<vmem>>, %arg3: memref<128x256xbf16, #tpu.memory_space<vmem>>, %arg4: memref<1x256xf32, #tpu.memory_space<vmem>>, %arg5: memref<64x256xf32, #tpu.memory_space<vmem>>) attributes {dimension_semantics = [#tpu.dimension_semantics<parallel>, #tpu.dimension_semantics<parallel>], iteration_bounds = array<i64: 2, 1>, scalar_prefetch = 0 : i64, scratch_operands = 0 : i64, tpu.core_type = #tpu.core_type<tc>, window_params = [{transform_indices = @transform_0, window_bounds = array<i64: 64, 128>}, {transform_indices = @transform_1, window_bounds = array<i64: 128, 256>}, {transform_indices = @transform_2, window_bounds = array<i64: 1, 256>}, {transform_indices = @transform_3, window_bounds = array<i64: 64, 256>}]} {
    %c0 = arith.constant 0 : index
    %c0_0 = arith.constant 0 : index
    %0 = vector.load %arg2[%c0, %c0_0] : memref<64x128xbf16, #tpu.memory_space<vmem>>, vector<64x128xbf16>
    %c0_1 = arith.constant 0 : index
    %c0_2 = arith.constant 0 : index
    %1 = vector.load %arg3[%c0_1, %c0_2] : memref<128x256xbf16, #tpu.memory_space<vmem>>, vector<128x256xbf16>
    %cst = arith.constant dense<0.000000e+00> : vector<64x256xf32>
    %2 = tpu.matmul %0, %1, %cst {dimension_numbers = #tpu.dot_dimension_numbers<[1], [0], [0], [1], [0, 0, 1, 1], [], []>} : vector<64x128xbf16>, vector<128x256xbf16>, vector<64x256xf32> -> vector<64x256xf32>
    %c0_3 = arith.constant 0 : index
    %c0_4 = arith.constant 0 : index
    %3 = vector.load %arg4[%c0_3, %c0_4] : memref<1x256xf32, #tpu.memory_space<vmem>>, vector<1x256xf32>
    %4 = vector.broadcast %3 : vector<1x256xf32> to vector<64x256xf32>
    %5 = arith.addf %2, %4 : vector<64x256xf32>
    %c0_5 = arith.constant 0 : index
    %c0_6 = arith.constant 0 : index
    %6 = vector.load %arg5[%c0_5, %c0_6] : memref<64x256xf32, #tpu.memory_space<vmem>>, vector<64x256xf32>
    tpu.vector_store %arg5[%c0_5, %c0_6], %5 {strides = array<i32>} : memref<64x256xf32, #tpu.memory_space<vmem>>, vector<64x256xf32>,
    return
  }
  func.func @transform_0(%arg0: i32, %arg1: i32) -> (i32, i32) {
    %c0_i32 = arith.constant 0 : i32
    %c0_i32_0 = arith.constant 0 : i32
    return %arg1, %c0_i32 : i32, i32
  }
  func.func @transform_1(%arg0: i32, %arg1: i32) -> (i32, i32) {
    %c0_i32 = arith.constant 0 : i32
    %c0_i32_0 = arith.constant 0 : i32
    return %c0_i32, %arg0 : i32, i32
  }
  func.func @transform_2(%arg0: i32, %arg1: i32) -> (i32, i32) {
    %c0_i32 = arith.constant 0 : i32
    %c0_i32_0 = arith.constant 0 : i32
    return %c0_i32, %arg0 : i32, i32
  }
  func.func @transform_3(%arg0: i32, %arg1: i32) -> (i32, i32) {
    %c0_i32 = arith.constant 0 : i32
    return %arg1, %arg0 : i32, i32
  }
}

</mosaic_0001>

<llo_original>
// kernel: tpu_custom_call.1
$region0: #{tpu_custom_call.1}
  #allocation0 [shape = 'u32[]', space=smem, size = 0x4, offset = 0x4, fixed_abs, tag = 'smem constant byte address 0x4 - core index']
  #allocation1 [shape = 'u32[144,128]{1,0:T(1,128)}', space=vmem, size = 0x12000, scoped, tag = 'internal scratch']
  %s0 = inlined_call_operand.hbm [shape: bf16[64,128], index: 0, kind: input, shape index: {}]
  %s1 = inlined_call_operand.hbm [shape: bf16[128,512], index: 1, kind: input, shape index: {}]
  %s2 = inlined_call_operand.vmem [shape: f32[1,512], index: 2, kind: input, shape index: {}]
  %s3 = inlined_call_operand.hbm [shape: f32[64,512], index: 3, kind: output, shape index: {}]
  %s4 = sld [smem:[#allocation0]]
  $region53: #{tpu_custom_call.1} parent=0
    _
  %s6 = ssub.s32 1, %s4
  %s7 = scalar_select 0, %s6, %s4
  $region1: #{tpu_custom_call.1} parent=0
    #allocation2 [shape = 'u8[16384]{0}', space=vmem, size = 0x4000, scoped, tag = 'input window, operand 0, single buffered']
    #allocation3 [shape = 's32[2]{0}', space=sflag, size = 0x8, scoped, tag = 'scoped memory for tpu_custom_call.1']
    #allocation4 [shape = 's32[2]{0}', space=sflag, size = 0x8, scoped, tag = 'scoped memory for tpu_custom_call.1']
    #allocation5 [shape = 'u8[131072]{0}', space=vmem, size = 0x20000, scoped, tag = 'input window, operand 1']
    #allocation6 [shape = 's32[2]{0}', space=sflag, size = 0x8, scoped, tag = 'scoped memory for tpu_custom_call.1']
    #allocation7 [shape = 'u8[131072]{0}', space=vmem, size = 0x20000, scoped, tag = 'output window, operand 0']
    %8 = vsyncpa [#allocation3], 0
    %9 = vsyncpa [#allocation6], 0
    %s10 = scalar_lea.sflag [#allocation6], 1
    %11 = vsyncpa %s10, 0
    %12 = vsyncpa [#allocation4], 0
    %s13 = scalar_lea.sflag [#allocation4], 1
    %14 = vsyncpa %s13, 0
    loop: start=0, step=1, limit=4
    $region2: #{tpu_custom_call.1} parent=1 // loop_pre_header
      _
    $region3: #{tpu_custom_call.1} parent=1 // loop_header
      %s16 = sphi 0, %s20
      %p17 = scmp.ge.s32.totalorder %s16, 4
      %s23 = sphi 0, %s35
      %s24 = sphi 0, %s31
      %s25 = sphi 0, %s23
      %s26 = sphi 0, %s24
      %s27 = sphi 0, %s25
      %s28 = sphi 0, %s26
      %s38 = sphi 0, %s40
      %s41 = sphi 0, %s38
      %s42 = sphi 0, %s41
      %s58 = sphi 0, %s42
      %s64 = sphi 0, %s66
      %s67 = sphi 0, %s64
      %s68 = sphi 0, %s67
      %s84 = sphi 0, %s68
      %s90 = sphi 0, %s92
      %s93 = sphi 0, %s90
      %s94 = sphi 0, %s93
      %s110 = sphi 0, %s94
      %s118 = sphi 0, %s120
      %s121 = sphi 0, %s118
      %s122 = sphi 0, %s121
      %s138 = sphi 0, %s122
    $region4: #{tpu_custom_call.1} parent=1 // loop_header_branch
      %19 = sbr.rel (%p17) target = $region8
    $region5: #{tpu_custom_call.1} parent=1 // loop_body
      %s21 = ssub.s32 %s16, 1
      %s22 = ssub.s32 %s16, 2
      %s29 = sadd.s32 1, %s24
      %p30 = scmp.ge.s32.totalorder %s29, 1
      %s31 = scalar_select %p30, 0, %s29
      %s32 = sadd.s32 1, %s23
      %s33 = scalar_select %p30, %s32, %s23
      %p34 = scmp.ge.s32.totalorder %s33, 2
      %s35 = scalar_select %p34, 0, %s33
      %s36 = ssub.s32 %s24, %s31
      %p37 = scmp.eq.s32.totalorder %s36, 0
      %s39 = sadd.s32 %s38, 1
      %s40 = scalar_select %p37, %s38, %s39
      %p43 = pneg %p37
      %p44 = scmp.eq.s32.totalorder %s16, 1
      %p45 = por %p43, %p44
      %p46 = scmp.ne.s32.totalorder %s38, %s41
      %p47 = scmp.eq.s32.totalorder %s16, 0
      %p48 = por %p46, %p47
      %p49 = scmp.ne.s32.totalorder %s38, %s41
      %p50 = scmp.eq.s32.totalorder %s21, 1
      %p51 = por %p49, %p50
      %p52 = scmp.ne.s32.totalorder %s41, %s42
      %p53 = scmp.eq.s32.totalorder %s21, 0
      %p54 = por %p52, %p53
      %p55 = scmp.ne.s32.totalorder %s41, %s42
      %p56 = scmp.eq.s32.totalorder %s22, 1
      %p57 = por %p55, %p56
      %p59 = scmp.ne.s32.totalorder %s42, %s58
      %p60 = scmp.eq.s32.totalorder %s22, 0
      %p61 = por %p59, %p60
      %s62 = ssub.s32 %s23, %s35
      %p63 = scmp.eq.s32.totalorder %s62, 0
      %s65 = sadd.s32 %s64, 1
      %s66 = scalar_select %p63, %s64, %s65
      %p69 = pneg %p63
      %p70 = scmp.eq.s32.totalorder %s16, 1
      %p71 = por %p69, %p70
      %p72 = scmp.ne.s32.totalorder %s64, %s67
      %p73 = scmp.eq.s32.totalorder %s16, 0
      %p74 = por %p72, %p73
      %p75 = scmp.ne.s32.totalorder %s64, %s67
      %p76 = scmp.eq.s32.totalorder %s21, 1
      %p77 = por %p75, %p76
      %p78 = scmp.ne.s32.totalorder %s67, %s68
      %p79 = scmp.eq.s32.totalorder %s21, 0
      %p80 = por %p78, %p79
      %p81 = scmp.ne.s32.totalorder %s67, %s68
      %p82 = scmp.eq.s32.totalorder %s22, 1
      %p83 = por %p81, %p82
      %p85 = scmp.ne.s32.totalorder %s68, %s84
      %p86 = scmp.eq.s32.totalorder %s22, 0
      %p87 = por %p85, %p86
      %s88 = ssub.s32 %s23, %s35
      %p89 = scmp.eq.s32.totalorder %s88, 0
      %s91 = sadd.s32 %s90, 1
      %s92 = scalar_select %p89, %s90, %s91
      %p95 = pneg %p89
      %p96 = scmp.eq.s32.totalorder %s16, 1
      %p97 = por %p95, %p96
      %p98 = scmp.ne.s32.totalorder %s90, %s93
      %p99 = scmp.eq.s32.totalorder %s16, 0
      %p100 = por %p98, %p99
      %p101 = scmp.ne.s32.totalorder %s90, %s93
      %p102 = scmp.eq.s32.totalorder %s21, 1
      %p103 = por %p101, %p102
      %p104 = scmp.ne.s32.totalorder %s93, %s94
      %p105 = scmp.eq.s32.totalorder %s21, 0
      %p106 = por %p104, %p105
      %p107 = scmp.ne.s32.totalorder %s93, %s94
      %p108 = scmp.eq.s32.totalorder %s22, 1
      %p109 = por %p107, %p108
      %p111 = scmp.ne.s32.totalorder %s94, %s110
      %p112 = scmp.eq.s32.totalorder %s22, 0
      %p113 = por %p111, %p112
      %s114 = ssub.s32 %s24, %s31
      %s115 = ssub.s32 %s23, %s35
      %s116 = sor.u32 %s114, %s115
      %p117 = scmp.eq.s32.totalorder %s116, 0
      %s119 = sadd.s32 %s118, 1
      %s120 = scalar_select %p117, %s118, %s119
      %p123 = pneg %p117
      %p124 = scmp.eq.s32.totalorder %s16, 1
      %p125 = por %p123, %p124
      %p126 = scmp.ne.s32.totalorder %s118, %s121
      %p127 = scmp.eq.s32.totalorder %s16, 0
      %p128 = por %p126, %p127
      %p129 = scmp.ne.s32.totalorder %s118, %s121
      %p130 = scmp.eq.s32.totalorder %s21, 1
      %p131 = por %p129, %p130
      %p132 = scmp.ne.s32.totalorder %s121, %s122
      %p133 = scmp.eq.s32.totalorder %s21, 0
      %p134 = por %p132, %p133
      %p135 = scmp.ne.s32.totalorder %s121, %s122
      %p136 = scmp.eq.s32.totalorder %s22, 1
      %p137 = por %p135, %p136
      %p139 = scmp.ne.s32.totalorder %s122, %s138
      %p140 = scmp.eq.s32.totalorder %s22, 0
      %p141 = por %p139, %p140
      %p142 = scmp.le.s32.totalorder 1, %s16
      %p143 = scmp.lt.s32.totalorder %s16, 3
      %p144 = pnand %p142, %p143
      %p145 = pneg %p144
      // Predicated region
      $region9: #{tpu_custom_call.1} parent=5 // pred_check
        _
      $region10: #{tpu_custom_call.1} parent=5 // pred_check_branch
        %147 = sbr.rel (%p144) target = $region12
      $region11: #{tpu_custom_call.1} parent=5 // pred_region
        %s148 = ssub.s32 %s16, 1
        // Predicated region
        $region13: #{tpu_custom_call.1} parent=11 // pred_check
          %p149 = pneg %p54
        $region14: #{tpu_custom_call.1} parent=11 // pred_check_branch
          %151 = sbr.rel (%p149) target = $region16
        $region15: #{tpu_custom_call.1} parent=11 // pred_region
          %s152 = smul.u32 8, %s26
          %s154 = ssub.s32 512, 512
          %155 = vsyncadd [#allocation3], %s154
          %s156 = smul.addr %s152, 64
          %s157 = scalar_lea.hbm %s0, %s156
          %s158 = sshll.u32 [#allocation2], 4
          %s159 = int_to_ptr.vmem [resolvable:$true] %s158
          %164 = dma.hbm_to_vmem [thread:$0]  %s157, 512, %s159, [#allocation3], 64, 64, 4
        $region16: #{tpu_custom_call.1} parent=11 // pred_fallthru
          _
      $region12: #{tpu_custom_call.1} parent=5 // pred_fallthru
        _
      %p165 = scmp.lt.s32.totalorder %s16, 2
      // Predicated region
      $region17: #{tpu_custom_call.1} parent=5 // pred_check
        %p166 = pneg %p165
      $region18: #{tpu_custom_call.1} parent=5 // pred_check_branch
        %168 = sbr.rel (%p166) target = $region20
      $region19: #{tpu_custom_call.1} parent=5 // pred_region
        // Predicated region
        $region21: #{tpu_custom_call.1} parent=19 // pred_check
          %p169 = pneg %p74
        $region22: #{tpu_custom_call.1} parent=19 // pred_check_branch
          %171 = sbr.rel (%p169) target = $region24
        $region23: #{tpu_custom_call.1} parent=19 // pred_region
          %s172 = sand.u32 %s64, 1
          %s173 = scalar_lea.sflag [#allocation6], %s172
          %s174 = sand.u32 %s64, 1
          %s175 = smul.addr %s174, 128
          %s176 = scalar_lea.vmem [#allocation5], %s175
          %s177 = smul.u32 2, %s23
          %s179 = ssub.s32 2048, 2048
          %180 = vsyncadd %s173, %s179
          %s181 = smul.addr %s177, 64
          %s182 = scalar_lea.hbm %s1, %s181
          %s183 = sshll.u32 %s176, 4
          %s184 = int_to_ptr.vmem [resolvable:$true] %s183
          %189 = dma.hbm_to_vmem [thread:$0]  %s182, 2048, %s184, %s173, 256, 128, 8
        $region24: #{tpu_custom_call.1} parent=19 // pred_fallthru
          _
        // Predicated region
        $region25: #{tpu_custom_call.1} parent=19 // pred_check
          %p190 = pneg %p100
        $region26: #{tpu_custom_call.1} parent=19 // pred_check_branch
          %192 = sbr.rel (%p190) target = $region28
        $region27: #{tpu_custom_call.1} parent=19 // pred_region
          %s193 = smul.u32 2, %s23
          %p194 = scmp.lt.s32.totalorder %s193, 3
          %s195 = scalar_select %p194, %s193, 3
          %s196 = scalar_lea.vmem %s2, %s195
          %s197 = smul.u32 2, %s23
        $region28: #{tpu_custom_call.1} parent=19 // pred_fallthru
          _
      $region20: #{tpu_custom_call.1} parent=5 // pred_fallthru
        _
      %p198 = scmp.le.s32.totalorder 1, %s16
      %p199 = scmp.lt.s32.totalorder %s16, 3
      %p200 = pnand %p198, %p199
      %p201 = pneg %p200
      // Predicated region
      $region29: #{tpu_custom_call.1} parent=5 // pred_check
        _
      $region30: #{tpu_custom_call.1} parent=5 // pred_check_branch
        %203 = sbr.rel (%p200) target = $region32
      $region31: #{tpu_custom_call.1} parent=5 // pred_region
        %s204 = ssub.s32 %s16, 1
        // Predicated region
        $region33: #{tpu_custom_call.1} parent=31 // pred_check
          %p205 = pneg %p54
        $region34: #{tpu_custom_call.1} parent=31 // pred_check_branch
          %207 = sbr.rel (%p205) target = $region36
        $region35: #{tpu_custom_call.1} parent=31 // pred_region
          %208 = dma.done [#allocation3], 512
        $region36: #{tpu_custom_call.1} parent=31 // pred_fallthru
          _
        %s209 = sand.u32 %s67, 1
        %s210 = scalar_lea.sflag [#allocation6], %s209
        %s211 = sand.u32 %s67, 1
        %s212 = smul.addr %s211, 128
        %s213 = scalar_lea.vmem [#allocation5], %s212
        // Predicated region
        $region37: #{tpu_custom_call.1} parent=31 // pred_check
          %p214 = pneg %p80
        $region38: #{tpu_custom_call.1} parent=31 // pred_check_branch
          %216 = sbr.rel (%p214) target = $region40
        $region39: #{tpu_custom_call.1} parent=31 // pred_region
          %217 = dma.done %s210, 2048
        $region40: #{tpu_custom_call.1} parent=31 // pred_fallthru
          _
        %p218 = pneg %p54
        %p219 = pneg %p51
        %s220 = sand.u32 %s67, 1
        %s221 = scalar_lea.sflag [#allocation6], %s220
        %s222 = sand.u32 %s67, 1
        %s223 = smul.addr %s222, 128
        %s224 = scalar_lea.vmem [#allocation5], %s223
        %p225 = pneg %p80
        %p226 = pneg %p77
        %s227 = smul.u32 2, %s25
        %p228 = scmp.lt.s32.totalorder %s227, 3
        %s229 = scalar_select %p228, %s227, 3
        %s230 = scalar_lea.vmem %s2, %s229
        %p231 = pneg %p106
        %p232 = pneg %p103
        %p233 = pneg %p134
        %p234 = pneg %p131
        %s235 = sand.u32 %s121, 1
        %s236 = scalar_lea.sflag [#allocation4], %s235
        %s237 = sand.u32 %s121, 1
        %s238 = smul.addr %s237, 128
        %s239 = scalar_lea.vmem [#allocation7], %s238
        %s240 = smul.u32 8, %s26
        %s241 = smul.u32 2, %s25
        %s242 = smul.u32 2, %s25
        %p243 = scmp.lt.s32.totalorder %s242, 3
        %s244 = scalar_select %p243, %s242, 3
        %s245 = scalar_lea.vmem %s2, %s244
        %s246 = smul.u32 2, %s25
        %s247 = smul.u32 8, %s26
        %s248 = smul.u32 2, %s25
        %v250 = vld [vmem:[#allocation2] sm:$0xf]
        %v251 = vld [vmem:[#allocation2 + $0x4] sm:$0xf]
        %v252 = vld [vmem:[#allocation2 + $0x8] sm:$0xf]
        %v253 = vld [vmem:[#allocation2 + $0xc] sm:$0xf]
        %v254 = vld [vmem:[#allocation2 + $0x10] sm:$0xf]
        %v255 = vld [vmem:[#allocation2 + $0x14] sm:$0xf]
        %v256 = vld [vmem:[#allocation2 + $0x18] sm:$0xf]
        %v257 = vld [vmem:[#allocation2 + $0x1c] sm:$0xf]
        %v258 = vld [vmem:[%s213] sm:$0xff]
        %v259 = vld [vmem:[%s213 + $0x8] sm:$0xff]
        %v260 = vld [vmem:[%s213 + $0x10] sm:$0xff]
        %v261 = vld [vmem:[%s213 + $0x18] sm:$0xff]
        %v262 = vld [vmem:[%s213 + $0x20] sm:$0xff]
        %v263 = vld [vmem:[%s213 + $0x28] sm:$0xff]
        %v264 = vld [vmem:[%s213 + $0x30] sm:$0xff]
        %v265 = vld [vmem:[%s213 + $0x38] sm:$0xff]
        %v266 = vld [vmem:[%s213 + $0x40] sm:$0xff]
        %v267 = vld [vmem:[%s213 + $0x48] sm:$0xff]
        %v268 = vld [vmem:[%s213 + $0x50] sm:$0xff]
        %v269 = vld [vmem:[%s213 + $0x58] sm:$0xff]
        %v270 = vld [vmem:[%s213 + $0x60] sm:$0xff]
        %v271 = vld [vmem:[%s213 + $0x68] sm:$0xff]
        %v272 = vld [vmem:[%s213 + $0x70] sm:$0xff]
        %v273 = vld [vmem:[%s213 + $0x78] sm:$0xff]
        %v274 = vld [vmem:[%s245] sm:$0x3]
        %v276 = vlaneseq
        %v277 = vshrl.u32 %v276, 7
        %v278 = vsub.s32 0, %v277
        %v279 = vrot.slane %v274, %v278
        %v280 = vlaneseq
        %v281 = vshrl.u32 %v280, 7
        %v282 = vsub.s32 1, %v281
        %v283 = vrot.slane %v274, %v282
        %v294 = vunpack.c.l.b16 %v250
        %v295 = vunpack.c.l.b16 %v251
        %v296 = vunpack.c.l.b16 %v252
        %v297 = vunpack.c.l.b16 %v253
        %v298 = vunpack.c.l.b16 %v254
        %v299 = vunpack.c.l.b16 %v255
        %v300 = vunpack.c.l.b16 %v256
        %v301 = vunpack.c.l.b16 %v257
        %v302 = vpack.c.b16 %v295, %v294
        %v303 = vpack.c.b16 %v297, %v296
        %v304 = vpack.c.b16 %v299, %v298
        %v305 = vpack.c.b16 %v301, %v300
        %v326 = vunpack.c.l.b16 %v258
        %v327 = vunpack.c.h.b16 %v258
        %v328 = vunpack.c.l.b16 %v259
        %v329 = vunpack.c.h.b16 %v259
        %v330 = vunpack.c.l.b16 %v260
        %v331 = vunpack.c.h.b16 %v260
        %v332 = vunpack.c.l.b16 %v261
        %v333 = vunpack.c.h.b16 %v261
        %v334 = vunpack.c.l.b16 %v262
        %v335 = vunpack.c.h.b16 %v262
        %v336 = vunpack.c.l.b16 %v263
        %v337 = vunpack.c.h.b16 %v263
        %v338 = vunpack.c.l.b16 %v264
        %v339 = vunpack.c.h.b16 %v264
        %v340 = vunpack.c.l.b16 %v265
        %v341 = vunpack.c.h.b16 %v265
        %v342 = vunpack.c.l.b16 %v266
        %v343 = vunpack.c.h.b16 %v266
        %v344 = vunpack.c.l.b16 %v267
        %v345 = vunpack.c.h.b16 %v267
        %v346 = vunpack.c.l.b16 %v268
        %v347 = vunpack.c.h.b16 %v268
        %v348 = vunpack.c.l.b16 %v269
        %v349 = vunpack.c.h.b16 %v269
        %v350 = vunpack.c.l.b16 %v270
        %v351 = vunpack.c.h.b16 %v270
        %v352 = vunpack.c.l.b16 %v271
        %v353 = vunpack.c.h.b16 %v271
        %v354 = vunpack.c.l.b16 %v272
        %v355 = vunpack.c.h.b16 %v272
        %v356 = vunpack.c.l.b16 %v273
        %v357 = vunpack.c.h.b16 %v273
        %v358 = vpack.c.b16 %v328, %v326
        %v359 = vpack.c.b16 %v329, %v327
        %v360 = vpack.c.b16 %v332, %v330
        %v361 = vpack.c.b16 %v333, %v331
        %v362 = vpack.c.b16 %v336, %v334
        %v363 = vpack.c.b16 %v337, %v335
        %v364 = vpack.c.b16 %v340, %v338
        %v365 = vpack.c.b16 %v341, %v339
        %v366 = vpack.c.b16 %v344, %v342
        %v367 = vpack.c.b16 %v345, %v343
        %v368 = vpack.c.b16 %v348, %v346
        %v369 = vpack.c.b16 %v349, %v347
        %v370 = vpack.c.b16 %v352, %v350
        %v371 = vpack.c.b16 %v353, %v351
        %v372 = vpack.c.b16 %v356, %v354
        %v373 = vpack.c.b16 %v357, %v355
        %390 = vmatprep.subr.bf16.mxu0 %v359
        %391 = vmatpush1.bf16.msra.mxu0 %v358
        %392 = vmatprep.subr.bf16.mxu0 %v361
        %393 = vmatpush1.bf16.msra.mxu0 %v360
        %394 = vmatprep.subr.bf16.mxu0 %v363
        %395 = vmatpush1.bf16.msra.mxu0 %v362
        %396 = vmatprep.subr.bf16.mxu0 %v365
        %397 = vmatpush1.bf16.msra.mxu0 %v364
        %398 = vmatprep.subr.bf16.mxu0 %v367
        %399 = vmatpush1.bf16.msra.mxu0 %v366
        %400 = vmatprep.subr.bf16.mxu0 %v369
        %401 = vmatpush1.bf16.msra.mxu0 %v368
        %402 = vmatprep.subr.bf16.mxu0 %v371
        %403 = vmatpush1.bf16.msra.mxu0 %v370
        %404 = vmatprep.subr.bf16.mxu0 %v373
        %405 = vmatpush1.bf16.msra.mxu0 %v372
        %406 = vmatprep.subr.bf16.mxu0 0
        %407 = vmatpush1.bf16.msra.mxu0 0
        %408 = vmatprep.subr.bf16.mxu0 0
        %409 = vmatpush1.bf16.msra.mxu0 0
        %410 = vmatprep.subr.bf16.mxu0 0
        %411 = vmatpush1.bf16.msra.mxu0 0
        %412 = vmatprep.subr.bf16.mxu0 0
        %413 = vmatpush1.bf16.msra.mxu0 0
        %414 = vmatprep.subr.bf16.mxu0 0
        %415 = vmatpush1.bf16.msra.mxu0 0
        %416 = vmatprep.subr.bf16.mxu0 0
        %417 = vmatpush1.bf16.msra.mxu0 0
        %418 = vmatprep.subr.bf16.mxu0 0
        %419 = vmatpush1.bf16.msra.mxu0 0
        %420 = vmatprep.subr.bf16.mxu0 0
        %421 = vmatpush1.bf16.msra.mxu0 0
        %422 = vmatprep.mubr.bf16.mxu0 0
        %423 = vmatmul.mubr.bf16.gmra.mrb[0].mxu0 %v302
        %v424 = vpop.f32.mrb[0].mxu0
        %v425 = vadd.f32 %v279, %v424
        %v426 = vpop.f32.mrb[0].mxu0
        %v427 = vadd.f32 %v283, %v426
        %v428 = vpop.f32.mrb[0].mxu0
        %v429 = vadd.f32 %v279, %v428
        %v430 = vpop.f32.mrb[0].mxu0
        %v431 = vadd.f32 %v283, %v430
        %432 = vmatprep.mubr.bf16.mxu0 0
        %433 = vmatmul.mubr.bf16.gmra.mrb[0].mxu0 %v303
        %v434 = vpop.f32.mrb[0].mxu0
        %v435 = vadd.f32 %v279, %v434
        %v436 = vpop.f32.mrb[0].mxu0
        %v437 = vadd.f32 %v283, %v436
        %v438 = vpop.f32.mrb[0].mxu0
        %v439 = vadd.f32 %v279, %v438
        %v440 = vpop.f32.mrb[0].mxu0
        %v441 = vadd.f32 %v283, %v440
        %442 = vmatprep.mubr.bf16.mxu0 0
        %443 = vmatmul.mubr.bf16.gmra.mrb[0].mxu0 %v304
        %v444 = vpop.f32.mrb[0].mxu0
        %v445 = vadd.f32 %v279, %v444
        %v446 = vpop.f32.mrb[0].mxu0
        %v447 = vadd.f32 %v283, %v446
        %v448 = vpop.f32.mrb[0].mxu0
        %v449 = vadd.f32 %v279, %v448
        %v450 = vpop.f32.mrb[0].mxu0
        %v451 = vadd.f32 %v283, %v450
        %452 = vmatprep.mubr.bf16.mxu0 0
        %453 = vmatmul.mubr.bf16.gmra.mrb[0].mxu0 %v305
        %v454 = vpop.f32.mrb[0].mxu0
        %v455 = vadd.f32 %v279, %v454
        %v456 = vpop.f32.mrb[0].mxu0
        %v457 = vadd.f32 %v283, %v456
        %v458 = vpop.f32.mrb[0].mxu0
        %v459 = vadd.f32 %v279, %v458
        %v460 = vpop.f32.mrb[0].mxu0
        %v461 = vadd.f32 %v283, %v460
        %462 = vdwg.mxu0
        %463 = vst [vmem:[%s239] sm:$0xff] %v425
        %464 = vst [vmem:[%s239 + $0x8] sm:$0xff] %v427
        %465 = vst [vmem:[%s239 + $0x10] sm:$0xff] %v429
        %466 = vst [vmem:[%s239 + $0x18] sm:$0xff] %v431
        %467 = vst [vmem:[%s239 + $0x20] sm:$0xff] %v435
        %468 = vst [vmem:[%s239 + $0x28] sm:$0xff] %v437
        %469 = vst [vmem:[%s239 + $0x30] sm:$0xff] %v439
        %470 = vst [vmem:[%s239 + $0x38] sm:$0xff] %v441
        %471 = vst [vmem:[%s239 + $0x40] sm:$0xff] %v445
        %472 = vst [vmem:[%s239 + $0x48] sm:$0xff] %v447
        %473 = vst [vmem:[%s239 + $0x50] sm:$0xff] %v449
        %474 = vst [vmem:[%s239 + $0x58] sm:$0xff] %v451
        %475 = vst [vmem:[%s239 + $0x60] sm:$0xff] %v455
        %476 = vst [vmem:[%s239 + $0x68] sm:$0xff] %v457
        %477 = vst [vmem:[%s239 + $0x70] sm:$0xff] %v459
        %478 = vst [vmem:[%s239 + $0x78] sm:$0xff] %v461
        %s479 = sand.u32 %s121, 1
        %s480 = scalar_lea.sflag [#allocation4], %s479
        %s481 = sand.u32 %s121, 1
        %s482 = smul.addr %s481, 128
        %s483 = scalar_lea.vmem [#allocation7], %s482
        // Predicated region
        $region41: #{tpu_custom_call.1} parent=31 // pred_check
          %p484 = pneg %p131
        $region42: #{tpu_custom_call.1} parent=31 // pred_check_branch
          %486 = sbr.rel (%p484) target = $region44
        $region43: #{tpu_custom_call.1} parent=31 // pred_region
          %s487 = smul.u32 8, %s26
          %s488 = smul.u32 2, %s25
          %s490 = ssub.s32 2048, 2048
          %491 = vsyncadd %s480, %s490
          %s492 = smul.addr %s487, 4
          %s493 = sadd.s32 %s488, %s492
          %s494 = smul.addr %s493, 128
          %s495 = scalar_lea.hbm %s3, %s494
          %s496 = sshll.u32 %s483, 4
          %s497 = int_to_ptr.vmem [resolvable:$true] %s496
          %502 = dma.vmem_to_hbm [thread:$0]  %s497, 2048, %s495, %s480, 256, 512, 16
        $region44: #{tpu_custom_call.1} parent=31 // pred_fallthru
          _
      $region32: #{tpu_custom_call.1} parent=5 // pred_fallthru
        _
      %p503 = scmp.le.s32.totalorder 2, %s16
      // Predicated region
      $region45: #{tpu_custom_call.1} parent=5 // pred_check
        %p504 = pneg %p503
      $region46: #{tpu_custom_call.1} parent=5 // pred_check_branch
        %506 = sbr.rel (%p504) target = $region48
      $region47: #{tpu_custom_call.1} parent=5 // pred_region
        %s507 = ssub.s32 %s16, 2
        // Predicated region
        $region49: #{tpu_custom_call.1} parent=47 // pred_check
          %p508 = pneg %p137
        $region50: #{tpu_custom_call.1} parent=47 // pred_check_branch
          %510 = sbr.rel (%p508) target = $region52
        $region51: #{tpu_custom_call.1} parent=47 // pred_region
          %s511 = sand.u32 %s122, 1
          %s512 = scalar_lea.sflag [#allocation4], %s511
          %s513 = sand.u32 %s122, 1
          %s514 = smul.addr %s513, 128
          %s515 = scalar_lea.vmem [#allocation7], %s514
          %516 = dma.done %s512, 2048
        $region52: #{tpu_custom_call.1} parent=47 // pred_fallthru
          _
      $region48: #{tpu_custom_call.1} parent=5 // pred_fallthru
        _
    $region6: #{tpu_custom_call.1} parent=1 // loop_footer
      %s20 = sadd.s32 1, %s16
    $region7: #{tpu_custom_call.1} parent=1 // loop_footer_branch
      %15 = sbr.rel target = $region3
    $region8: #{tpu_custom_call.1} parent=1 // loop_exit
      _
    %517 = vsyncpa [#allocation3], 1
    %s518 = scalar_lea.sflag [#allocation3], 1
    %519 = vsyncpa %s518, 1
    %520 = vsyncpa [#allocation6], 1
    %s521 = scalar_lea.sflag [#allocation6], 1
    %522 = vsyncpa %s521, 1
    %523 = vsyncpa [#allocation4], 1
    %s524 = scalar_lea.sflag [#allocation4], 1
    %525 = vsyncpa %s524, 1

</llo_original>
